<compile_context>
chip_gen: v7x
topology: tpu7x:2x2x1
jax: 0.10.0
libtpu: 0.0.40
codegen_flags: <defaults>
</compile_context>

<pallas_src>
import functools

import jax
import jax.numpy as jnp
from jax.experimental import pallas as pl
from jax.experimental.pallas import tpu as pltpu


def _round_up(x: int, m: int) -> int:
    return (x + m - 1) // m * m


# -----------------------------------------------------------------------------
# Pallas kernel: fused dropout + tag-head linear  (out = dropout(x) @ W^T + b)
# -----------------------------------------------------------------------------
def _dropout_linear_kernel(seed_ref, x_ref, w_ref, b_ref, o_ref, *, p, training):
    # x_ref: (tm, H)      block of flattened hidden states (bf16)
    # w_ref: (H, N_pad)   full transposed weight, lane-padded to 128 (bf16)
    # b_ref: (1, N_pad)   lane-padded bias (f32)
    # o_ref: (tm, N_pad)  f32 logits block
    x = x_ref[...]

    if training and p > 0.0:
        tm, h = x.shape
        seed = seed_ref[0]
        row0 = pl.program_id(0) * tm
        rows = jax.lax.broadcasted_iota(jnp.int32, (tm, h), 0) + row0
        cols = jax.lax.broadcasted_iota(jnp.int32, (tm, h), 1)
        # Counter-based hash: unique per (seed, global element index); pattern
        # does not depend on the tile size.  Wraparound arithmetic is fine.
        u = (rows * jnp.int32(h) + cols).astype(jnp.uint32)
        u = u + seed.astype(jnp.uint32) * jnp.uint32(0x9E3779B9)
        u = u ^ (u >> 16)
        u = u * jnp.uint32(0x7FEB352D)
        u = u ^ (u >> 15)
        u = u * jnp.uint32(0x846CA68B)
        u = u ^ (u >> 16)
        # Integer threshold on the low 23 bits (no float conversion needed).
        bits = jnp.bitwise_and(u, jnp.uint32(0x7FFFFF)).astype(jnp.int32)
        thresh = jnp.int32(int(p * float(1 << 23)))
        keep = bits >= thresh
        scale = jnp.asarray(1.0 / (1.0 - p), dtype=x.dtype)
        x = jnp.where(keep, x * scale, jnp.zeros_like(x))

    out = jnp.dot(x, w_ref[...], preferred_element_type=jnp.float32)
    o_ref[...] = (out + b_ref[...]).astype(o_ref.dtype)


def tag_head(hidden, weight, bias, seed, *, dropout_p=0.1, training=True,
             tm=None, compute_dtype=jnp.bfloat16):
    """Apply dropout + nn.Linear(hidden_size, n_tags) with a fused Pallas kernel.

    hidden: [B, S, H] float32
    weight: [n_tags, H]  (PyTorch nn.Linear convention)
    bias:   [n_tags]
    """
    B, S, H = hidden.shape
    n_tags = weight.shape[0]
    M = B * S

    # Row tile: as large as reasonable (HBM-roofline friendly), capped at 512,
    # never larger than the (8-rounded) data.  M is padded up to a tile multiple
    # so arbitrary B*S works with big tiles.
    if tm is None:
        tm = min(512, _round_up(M, 8))
    M_pad = _round_up(M, tm)
    # Lane-dense output: pad the tag dimension to a multiple of 128.
    N_pad = _round_up(max(n_tags, 128), 128)

    x = hidden.reshape(M, H).astype(compute_dtype)
    if M_pad != M:
        x = jnp.pad(x, ((0, M_pad - M), (0, 0)))

    w_t = weight.T.astype(compute_dtype)                    # [H, n_tags]
    w_t = jnp.pad(w_t, ((0, 0), (0, N_pad - n_tags)))       # exact-zero lane pad
    b2 = jnp.pad(bias.astype(jnp.float32), (0, N_pad - n_tags)).reshape(1, N_pad)

    seed_arr = jnp.asarray([seed], dtype=jnp.int32)
    kernel = functools.partial(_dropout_linear_kernel,
                               p=float(dropout_p), training=bool(training))

    in_bytes = jnp.dtype(compute_dtype).itemsize
    cost = pl.CostEstimate(
        flops=2 * M_pad * H * N_pad,
        transcendentals=0,
        bytes_accessed=M_pad * H * in_bytes + H * N_pad * in_bytes + M_pad * N_pad * 4,
    )

    out = pl.pallas_call(
        kernel,
        out_shape=jax.ShapeDtypeStruct((M_pad, N_pad), jnp.float32),
        grid_spec=pltpu.PrefetchScalarGridSpec(
            num_scalar_prefetch=1,                               # seed -> SMEM
            grid=(M_pad // tm,),
            in_specs=[
                pl.BlockSpec((tm, H), lambda i, seed: (i, 0)),       # x row tile
                pl.BlockSpec((H, N_pad), lambda i, seed: (0, 0)),    # full W^T
                pl.BlockSpec((1, N_pad), lambda i, seed: (0, 0)),    # bias
            ],
            out_specs=pl.BlockSpec((tm, N_pad), lambda i, seed: (i, 0)),
        ),
        compiler_params=pltpu.CompilerParams(
            # disjoint output rows per grid step -> safe to shard across cores
            dimension_semantics=("parallel",),
            # keep double-buffered tiles within v7x's smaller VMEM
            vmem_limit_bytes=64 * 1024 * 1024,
        ),
        cost_estimate=cost,
    )(seed_arr, x, w_t, b2)

    return out[:M, :n_tags].reshape(B, S, n_tags)


# -----------------------------------------------------------------------------
# Stand-in "transformer": word + token-type + position embeddings + LayerNorm.
# Plain-JAX glue producing the [B, S, H] hidden states the tag head consumes.
# -----------------------------------------------------------------------------
def standin_transformer(params, input_ids, masks, token_type_ids):
    h = (params["word_emb"][input_ids]
         + params["type_emb"][token_type_ids]
         + params["pos_emb"][None, : input_ids.shape[1], :])
    # zero out padding positions via the attention mask
    h = h * masks[..., None].astype(h.dtype)
    mu = jnp.mean(h, axis=-1, keepdims=True)
    var = jnp.mean((h - mu) ** 2, axis=-1, keepdims=True)
    h = (h - mu) * jax.lax.rsqrt(var + 1e-12)
    h = h * params["ln_gamma"] + params["ln_beta"]
    return h  # [B, S, H]  ~ transformer_outputs[0]


def nerda_forward(params, input_ids, masks, token_type_ids, target_tags, offsets,
                  *, dropout_p=0.1, training=True, seed=0):
    # target_tags / offsets are accepted but unused, matching the PyTorch module.
    del target_tags, offsets
    hidden = standin_transformer(params, input_ids, masks, token_type_ids)
    logits = tag_head(hidden, params["tags_w"], params["tags_b"], seed,
                      dropout_p=dropout_p, training=training)
    return logits, hidden


# -----------------------------------------------------------------------------
# Deterministic parameter init + example run
# -----------------------------------------------------------------------------
def init_params(key, vocab_size, n_types, max_seq, hidden, n_tags):
    ks = jax.random.split(key, 6)
    return {
        "word_emb": jax.random.normal(ks[0], (vocab_size, hidden), jnp.float32) * 0.02,
        "type_emb": jax.random.normal(ks[1], (n_types, hidden), jnp.float32) * 0.02,
        "pos_emb": jax.random.normal(ks[2], (max_seq, hidden), jnp.float32) * 0.02,
        "ln_gamma": jnp.ones((hidden,), jnp.float32),
        "ln_beta": jnp.zeros((hidden,), jnp.float32),
        # nn.Linear(hidden_size, n_tags): weight [n_tags, hidden], bias [n_tags]
        "tags_w": jax.random.normal(ks[3], (n_tags, hidden), jnp.float32) * 0.05,
        "tags_b": jax.random.normal(ks[4], (n_tags,), jnp.float32) * 0.01,
    }


if __name__ == "__main__":
    B, S, H = 2, 8, 32
    VOCAB, N_TYPES, N_TAGS = 100, 2, 9

    key = jax.random.PRNGKey(0)
    k_params, k_ids, k_tags = jax.random.split(key, 3)

    params = init_params(k_params, VOCAB, N_TYPES, S, H, N_TAGS)

    input_ids = jax.random.randint(k_ids, (B, S), 0, VOCAB, dtype=jnp.int32)
    masks = jnp.ones((B, S), dtype=jnp.int32)
    token_type_ids = jnp.zeros((B, S), dtype=jnp.int32)
    target_tags = jax.random.randint(k_tags, (B, S), 0, N_TAGS, dtype=jnp.int32)
    offsets = jnp.zeros((B, S), dtype=jnp.int32)

    logits, hidden = nerda_forward(
        params, input_ids, masks, token_type_ids, target_tags, offsets,
        dropout_p=0.1, training=True, seed=0)

    jax.block_until_ready(logits)
    jax.block_until_ready(hidden)

    assert logits.shape == (B, S, N_TAGS), logits.shape
    assert hidden.shape == (B, S, H), hidden.shape
    assert bool(jnp.all(jnp.isfinite(logits)))

    # Eval-mode (no dropout) sanity check against a plain-JAX reference.
    logits_eval = tag_head(hidden, params["tags_w"], params["tags_b"], 0,
                           dropout_p=0.1, training=False,
                           compute_dtype=jnp.float32)
    ref = hidden.reshape(-1, H) @ params["tags_w"].T + params["tags_b"]
    assert bool(jnp.allclose(logits_eval.reshape(-1, N_TAGS), ref,
                             atol=1e-4, rtol=1e-4))

    print("KERNEL_OK")
</pallas_src>

<mosaic_0001>
module attributes {stable_mosaic.version = 11 : i64} {
  func.func @_dropout_linear_kernel(%arg0: i32, %arg1: memref<1xi32, #tpu.memory_space<smem>>, %arg2: memref<16x32xbf16, #tpu.memory_space<vmem>>, %arg3: memref<32x128xbf16, #tpu.memory_space<vmem>>, %arg4: memref<1x128xf32, #tpu.memory_space<vmem>>, %arg5: memref<16x128xf32, #tpu.memory_space<vmem>>) attributes {dimension_semantics = [#tpu.dimension_semantics<parallel>], iteration_bounds = array<i64: 1>, scalar_prefetch = 1 : i64, scratch_operands = 0 : i64, tpu.core_type = #tpu.core_type<tc>, window_params = [{transform_indices = @transform_0, window_bounds = array<i64: 16, 32>}, {pipeline_mode = #tpu.pipeline_mode<synchronous>, transform_indices = @transform_1, window_bounds = array<i64: 32, 128>}, {pipeline_mode = #tpu.pipeline_mode<synchronous>, transform_indices = @transform_2, window_bounds = array<i64: 1, 128>}, {transform_indices = @transform_3, window_bounds = array<i64: 16, 128>}]} {
    %c0 = arith.constant 0 : index
    %c0_0 = arith.constant 0 : index
    %0 = vector.load %arg2[%c0, %c0_0] : memref<16x32xbf16, #tpu.memory_space<vmem>>, vector<16x32xbf16>
    %c0_1 = arith.constant 0 : index
    %1 = memref.load %arg1[%c0_1] : memref<1xi32, #tpu.memory_space<smem>>
    %c16_i32 = arith.constant 16 : i32
    %2 = arith.muli %arg0, %c16_i32 : i32
    %3 = tpu.iota {dimensions = array<i32: 0>} : vector<16x32xi32>
    %4 = vector.broadcast %2 : i32 to vector<16x32xi32>
    %5 = arith.addi %3, %4 : vector<16x32xi32>
    %6 = tpu.iota {dimensions = array<i32: 1>} : vector<16x32xi32>
    %c32_i32 = arith.constant 32 : i32
    %7 = vector.broadcast %c32_i32 : i32 to vector<16x32xi32>
    %8 = arith.muli %5, %7 : vector<16x32xi32>
    %9 = arith.addi %8, %6 : vector<16x32xi32>
    %c-1640531527_i32 = arith.constant -1640531527 : i32
    %10 = arith.muli %1, %c-1640531527_i32 : i32
    %11 = vector.broadcast %10 : i32 to vector<16x32xi32>
    %12 = arith.addi %9, %11 : vector<16x32xi32>
    %c16_i32_2 = arith.constant 16 : i32
    %13 = vector.broadcast %c16_i32_2 : i32 to vector<16x32xi32>
    %14 = arith.shrui %12, %13 : vector<16x32xi32>
    %15 = arith.xori %12, %14 : vector<16x32xi32>
    %c2146121005_i32 = arith.constant 2146121005 : i32
    %16 = vector.broadcast %c2146121005_i32 : i32 to vector<16x32xi32>
    %17 = arith.muli %15, %16 : vector<16x32xi32>
    %c15_i32 = arith.constant 15 : i32
    %18 = vector.broadcast %c15_i32 : i32 to vector<16x32xi32>
    %19 = arith.shrui %17, %18 : vector<16x32xi32>
    %20 = arith.xori %17, %19 : vector<16x32xi32>
    %c-2073254261_i32 = arith.constant -2073254261 : i32
    %21 = vector.broadcast %c-2073254261_i32 : i32 to vector<16x32xi32>
    %22 = arith.muli %20, %21 : vector<16x32xi32>
    %c16_i32_3 = arith.constant 16 : i32
    %23 = vector.broadcast %c16_i32_3 : i32 to vector<16x32xi32>
    %24 = arith.shrui %22, %23 : vector<16x32xi32>
    %25 = arith.xori %22, %24 : vector<16x32xi32>
    %c8388607_i32 = arith.constant 8388607 : i32
    %26 = vector.broadcast %c8388607_i32 : i32 to vector<16x32xi32>
    %27 = arith.andi %25, %26 : vector<16x32xi32>
    %c838860_i32 = arith.constant 838860 : i32
    %28 = vector.broadcast %c838860_i32 : i32 to vector<16x32xi32>
    %29 = arith.cmpi sge, %27, %28 : vector<16x32xi32>
    %cst = arith.constant 1.109380e+00 : bf16
    %30 = vector.broadcast %cst : bf16 to vector<16x32xbf16>
    %31 = arith.mulf %0, %30 : vector<16x32xbf16>
    %cst_4 = arith.constant 0.000000e+00 : bf16
    %32 = vector.broadcast %cst_4 : bf16 to vector<16x32xbf16>
    %33 = arith.select %29, %31, %32 : vector<16x32xi1>, vector<16x32xbf16>
    %c0_5 = arith.constant 0 : index
    %c0_6 = arith.constant 0 : index
    %34 = vector.load %arg3[%c0_5, %c0_6] : memref<32x128xbf16, #tpu.memory_space<vmem>>, vector<32x128xbf16>
    %cst_7 = arith.constant dense<0.000000e+00> : vector<16x128xf32>
    %35 = tpu.matmul %33, %34, %cst_7 {dimension_numbers = #tpu.dot_dimension_numbers<[1], [0], [0], [1], [0, 0, 1, 1], [], []>} : vector<16x32xbf16>, vector<32x128xbf16>, vector<16x128xf32> -> vector<16x128xf32>
    %c0_8 = arith.constant 0 : index
    %c0_9 = arith.constant 0 : index
    %36 = vector.load %arg4[%c0_8, %c0_9] : memref<1x128xf32, #tpu.memory_space<vmem>>, vector<1x128xf32>
    %37 = vector.broadcast %36 : vector<1x128xf32> to vector<16x128xf32>
    %38 = arith.addf %35, %37 : vector<16x128xf32>
    %c0_10 = arith.constant 0 : index
    %c0_11 = arith.constant 0 : index
    %39 = vector.load %arg5[%c0_10, %c0_11] : memref<16x128xf32, #tpu.memory_space<vmem>>, vector<16x128xf32>
    tpu.vector_store %arg5[%c0_10, %c0_11], %38 {strides = array<i32>} : memref<16x128xf32, #tpu.memory_space<vmem>>, vector<16x128xf32>,
    return
  }
  func.func @transform_0(%arg0: i32, %arg1: memref<1xi32, #tpu.memory_space<smem>>) -> (i32, i32) {
    %c0_i32 = arith.constant 0 : i32
    %c0_i32_0 = arith.constant 0 : i32
    return %arg0, %c0_i32 : i32, i32
  }
  func.func @transform_1(%arg0: i32, %arg1: memref<1xi32, #tpu.memory_space<smem>>) -> (i32, i32) {
    %c0_i32 = arith.constant 0 : i32
    %c0_i32_0 = arith.constant 0 : i32
    %c0_i32_1 = arith.constant 0 : i32
    return %c0_i32, %c0_i32_0 : i32, i32
  }
  func.func @transform_2(%arg0: i32, %arg1: memref<1xi32, #tpu.memory_space<smem>>) -> (i32, i32) {
    %c0_i32 = arith.constant 0 : i32
    %c0_i32_0 = arith.constant 0 : i32
    %c0_i32_1 = arith.constant 0 : i32
    return %c0_i32, %c0_i32_0 : i32, i32
  }
  func.func @transform_3(%arg0: i32, %arg1: memref<1xi32, #tpu.memory_space<smem>>) -> (i32, i32) {
    %c0_i32 = arith.constant 0 : i32
    %c0_i32_0 = arith.constant 0 : i32
    return %arg0, %c0_i32 : i32, i32
  }
}

</mosaic_0001>

<llo_original>
// kernel: tpu_custom_call.1
$region0: #{tpu_custom_call.1}
  #allocation0 [shape = 'u32[]', space=smem, size = 0x4, offset = 0x4, fixed_abs, tag = 'smem constant byte address 0x4 - core index']
  #allocation1 [shape = 'u32[144,128]{1,0:T(1,128)}', space=vmem, size = 0x12000, scoped, tag = 'internal scratch']
  #allocation2 [shape = 's32[1]{0}', space=sflag, size = 0x4, scoped, tag = 'scoped memory for tpu_custom_call.1']
  #allocation3 [shape = 's32[1]{0:T(128)S(6)}', space=smem, size = 0x200, scoped, tag = 'prefetched SMEM operand 0']
  %s0 = inlined_call_operand.<no memory space> [shape: s32[1], index: 0, kind: input, shape index: {}]
  %s1 = inlined_call_operand.hbm [shape: bf16[16,32], index: 1, kind: input, shape index: {}]
  %s2 = inlined_call_operand.hbm [shape: bf16[32,128], index: 2, kind: input, shape index: {}]
  %s3 = inlined_call_operand.hbm [shape: f32[1,128], index: 3, kind: input, shape index: {}]
  %s4 = inlined_call_operand.hbm [shape: f32[16,128], index: 4, kind: output, shape index: {}]
  %s5 = sld [smem:[#allocation0]]
  $region34: #{tpu_custom_call.1} parent=0
    _
  %s7 = ssub.s32 1, %s5
  %s8 = scalar_select 0, %s7, %s5
  %9 = sst [smem:[#allocation3]] %s0
  $region1: #{tpu_custom_call.1} parent=0
    #allocation4 [shape = 'u8[4096]{0}', space=vmem, size = 0x1000, scoped, tag = 'input window, operand 1, single buffered']
    #allocation5 [shape = 's32[1]{0}', space=sflag, size = 0x4, scoped, tag = 'scoped memory for tpu_custom_call.1']
    #allocation6 [shape = 's32[1]{0}', space=sflag, size = 0x4, scoped, tag = 'scoped memory for tpu_custom_call.1']
    #allocation7 [shape = 'u8[8192]{0}', space=vmem, size = 0x2000, scoped, tag = 'input window, operand 2, single buffered']
    #allocation8 [shape = 's32[1]{0}', space=sflag, size = 0x4, scoped, tag = 'scoped memory for tpu_custom_call.1']
    #allocation9 [shape = 'u8[512]{0}', space=vmem, size = 0x400, scoped, tag = 'input window, operand 3, single buffered']
    #allocation10 [shape = 'u8[8192]{0}', space=vmem, size = 0x2000, scoped, tag = 'output window, operand 0, single buffered']
    %10 = vsyncpa [#allocation5], 0
    %11 = vsyncpa [#allocation8], 0
    %12 = vsyncpa [#allocation6], 0
    // Predicated region
    $region2: #{tpu_custom_call.1} parent=1 // pred_check
      _
    $region3: #{tpu_custom_call.1} parent=1 // pred_check_branch
      %14 = sbr.rel (0) target = $region5
    $region4: #{tpu_custom_call.1} parent=1 // pred_region
      %s16 = ssub.s32 128, 128
      %17 = vsyncadd [#allocation5], %s16
      %s18 = sshll.u32 [#allocation4], 4
      %s19 = int_to_ptr.vmem [resolvable:$true] %s18
      %24 = dma.hbm_to_vmem [thread:$0]  %s1, 128, %s19, [#allocation5], 64, 64, 4
    $region5: #{tpu_custom_call.1} parent=1 // pred_fallthru
      _
    // Predicated region
    $region6: #{tpu_custom_call.1} parent=1 // pred_check
      _
    $region7: #{tpu_custom_call.1} parent=1 // pred_check_branch
      %26 = sbr.rel (0) target = $region9
    $region8: #{tpu_custom_call.1} parent=1 // pred_region
      %s28 = ssub.s32 256, 256
      %29 = vsyncadd [#allocation8], %s28
      %s30 = sshll.u32 [#allocation7], 4
      %s31 = int_to_ptr.vmem [resolvable:$true] %s30
      %36 = dma.hbm_to_vmem [thread:$0]  %s2, 256, %s31, [#allocation8], 64, 64, 4
    $region9: #{tpu_custom_call.1} parent=1 // pred_fallthru
      _
    // Predicated region
    $region10: #{tpu_custom_call.1} parent=1 // pred_check
      _
    $region11: #{tpu_custom_call.1} parent=1 // pred_check_branch
      %38 = sbr.rel (0) target = $region13
    $region12: #{tpu_custom_call.1} parent=1 // pred_region
      %s40 = ssub.s32 16, 16
      %41 = vsyncadd [#allocation8], %s40
      %s43 = sshll.u32 [#allocation9], 4
      %s44 = int_to_ptr.vmem [resolvable:$true] %s43
      %46 = dma.hbm_to_vmem [thread:$0]  %s3, 16, %s44, [#allocation8]
    $region13: #{tpu_custom_call.1} parent=1 // pred_fallthru
      _
    // Predicated region
    $region14: #{tpu_custom_call.1} parent=1 // pred_check
      _
    $region15: #{tpu_custom_call.1} parent=1 // pred_check_branch
      %48 = sbr.rel (0) target = $region17
    $region16: #{tpu_custom_call.1} parent=1 // pred_region
      %49 = dma.done [#allocation5], 128
    $region17: #{tpu_custom_call.1} parent=1 // pred_fallthru
      _
    // Predicated region
    $region18: #{tpu_custom_call.1} parent=1 // pred_check
      _
    $region19: #{tpu_custom_call.1} parent=1 // pred_check_branch
      %51 = sbr.rel (0) target = $region21
    $region20: #{tpu_custom_call.1} parent=1 // pred_region
      %52 = dma.done [#allocation8], 256
    $region21: #{tpu_custom_call.1} parent=1 // pred_fallthru
      _
    // Predicated region
    $region22: #{tpu_custom_call.1} parent=1 // pred_check
      _
    $region23: #{tpu_custom_call.1} parent=1 // pred_check_branch
      %54 = sbr.rel (0) target = $region25
    $region24: #{tpu_custom_call.1} parent=1 // pred_region
      %55 = dma.done [#allocation8], 16
    $region25: #{tpu_custom_call.1} parent=1 // pred_fallthru
      _
    %v58 = vld [vmem:[#allocation4] sm:$0xf]
    %v59 = vld [vmem:[#allocation4 + $0x4] sm:$0xf]
    %s60 = sld [smem:[#allocation3]]
    %s61 = smul.u32 0, 16
    %v62 = vlaneseq
    %v63 = vshrl.u32 %v62, 7
    %v64 = vadd.s32 %v63, 8
    %v65 = vstv %s61
    %v66 = vadd.s32 %v63, %v65
    %v67 = vadd.s32 %v64, %v65
    %v68 = vlaneseq
    %v69 = vand.u32 %v68, 127
    %v70 = vmul.u32 %v66, 32
    %v71 = vmul.u32 %v67, 32
    %v72 = vadd.s32 %v70, %v69
    %v73 = vadd.s32 %v71, %v69
    %s74 = smul.u32 %s60, 2654435769
    %v75 = vstv %s74
    %v76 = vadd.s32 %v72, %v75
    %v77 = vadd.s32 %v73, %v75
    %v78 = vshrl.u32 %v76, 16
    %v79 = vshrl.u32 %v77, 16
    %v80 = vxor.u32 %v76, %v78
    %v81 = vxor.u32 %v77, %v79
    %v82 = vmul.u32 %v80, 2146121005
    %v83 = vmul.u32 %v81, 2146121005
    %v84 = vshrl.u32 %v82, 15
    %v85 = vshrl.u32 %v83, 15
    %v86 = vxor.u32 %v82, %v84
    %v87 = vxor.u32 %v83, %v85
    %v88 = vmul.u32 %v86, 2221713035
    %v89 = vmul.u32 %v87, 2221713035
    %v90 = vshrl.u32 %v88, 16
    %v91 = vshrl.u32 %v89, 16
    %v92 = vxor.u32 %v88, %v90
    %v93 = vxor.u32 %v89, %v91
    %v94 = vand.u32 %v92, 8388607
    %v95 = vand.u32 %v93, 8388607
    %vm96 = vcmp.ge.s32.totalorder %v94, 838860
    %vm97 = vcmp.ge.s32.totalorder %v95, 838860
    %v98 = vmul.bf16 %v58, 1066286990
    %v99 = vmul.bf16 %v59, 1066286990
    %vm100 = vmpackc.low %vm96, %vm96
    %vm101 = vmpackc.low %vm97, %vm97
    %v102 = vsel %vm100, %v98, 0
    %v103 = vsel %vm101, %v99, 0
    %v104 = vld [vmem:[#allocation7] sm:$0xf]
    %v105 = vld [vmem:[#allocation7 + $0x4] sm:$0xf]
    %v106 = vld [vmem:[#allocation7 + $0x8] sm:$0xf]
    %v107 = vld [vmem:[#allocation7 + $0xc] sm:$0xf]
    %v108 = vld [vmem:[#allocation9] sm:$0x1]
    %v110 = vlaneseq
    %v111 = vshrl.u32 %v110, 7
    %v112 = vsub.s32 0, %v111
    %v113 = vrot.slane %v108, %v112
    %v117 = vunpack.c.l.b16 %v102
    %v118 = vunpack.c.l.b16 %v103
    %v119 = vpack.c.b16 %v118, %v117
    %v124 = vunpack.c.l.b16 %v104
    %v125 = vunpack.c.l.b16 %v105
    %v126 = vunpack.c.l.b16 %v106
    %v127 = vunpack.c.l.b16 %v107
    %v128 = vpack.c.b16 %v125, %v124
    %v129 = vpack.c.b16 %v127, %v126
    %vm132 = vcmask 261120
    %v134 = vsel %vm132, %v119, 0
    %136 = vmatprep.subr.bf16.mxu0 0
    %137 = vmatpush1.bf16.msra.mxu0 %v128
    %138 = vmatprep.subr.bf16.mxu0 0
    %139 = vmatpush1.bf16.msra.mxu0 %v129
    %140 = vmatprep.subr.bf16.mxu0 0
    %141 = vmatpush1.bf16.msra.mxu0 0
    %142 = vmatprep.subr.bf16.mxu0 0
    %143 = vmatpush1.bf16.msra.mxu0 0
    %144 = vmatprep.subr.bf16.mxu0 0
    %145 = vmatpush1.bf16.msra.mxu0 0
    %146 = vmatprep.subr.bf16.mxu0 0
    %147 = vmatpush1.bf16.msra.mxu0 0
    %148 = vmatprep.subr.bf16.mxu0 0
    %149 = vmatpush1.bf16.msra.mxu0 0
    %150 = vmatprep.subr.bf16.mxu0 0
    %151 = vmatpush1.bf16.msra.mxu0 0
    %152 = vmatprep.subr.bf16.mxu0 0
    %153 = vmatpush1.bf16.msra.mxu0 0
    %154 = vmatprep.subr.bf16.mxu0 0
    %155 = vmatpush1.bf16.msra.mxu0 0
    %156 = vmatprep.subr.bf16.mxu0 0
    %157 = vmatpush1.bf16.msra.mxu0 0
    %158 = vmatprep.subr.bf16.mxu0 0
    %159 = vmatpush1.bf16.msra.mxu0 0
    %160 = vmatprep.subr.bf16.mxu0 0
    %161 = vmatpush1.bf16.msra.mxu0 0
    %162 = vmatprep.subr.bf16.mxu0 0
    %163 = vmatpush1.bf16.msra.mxu0 0
    %164 = vmatprep.subr.bf16.mxu0 0
    %165 = vmatpush1.bf16.msra.mxu0 0
    %166 = vmatprep.subr.bf16.mxu0 0
    %167 = vmatpush1.bf16.msra.mxu0 0
    %168 = vmatprep.mubr.bf16.mxu0 0
    %169 = vmatmul.mubr.bf16.gmra.mrb[0].mxu0 %v134
    %v170 = vpop.f32.mrb[0].mxu0
    %v171 = vadd.f32 %v113, %v170
    %v172 = vpop.f32.mrb[0].mxu0
    %v173 = vpop.f32.mrb[0].mxu0
    %v174 = vadd.f32 %v113, %v173
    %v175 = vpop.f32.mrb[0].mxu0
    %176 = vdwg.mxu0
    %177 = vst [vmem:[#allocation10] sm:$0xff] %v171
    %178 = vst [vmem:[#allocation10 + $0x8] sm:$0xff] %v174
    // Predicated region
    $region26: #{tpu_custom_call.1} parent=1 // pred_check
      _
    $region27: #{tpu_custom_call.1} parent=1 // pred_check_branch
      %180 = sbr.rel (0) target = $region29
    $region28: #{tpu_custom_call.1} parent=1 // pred_region
      %s182 = ssub.s32 256, 256
      %183 = vsyncadd [#allocation6], %s182
      %s184 = sshll.u32 [#allocation10], 4
      %s185 = int_to_ptr.vmem [resolvable:$true] %s184
      %190 = dma.vmem_to_hbm [thread:$0]  %s185, 256, %s4, [#allocation6], 128, 128, 8
    $region29: #{tpu_custom_call.1} parent=1 // pred_fallthru
      _
    // Predicated region
    $region30: #{tpu_custom_call.1} parent=1 // pred_check
      _
    $region31: #{tpu_custom_call.1} parent=1 // pred_check_branch
      %192 = sbr.rel (0) target = $region33
    $region32: #{tpu_custom_call.1} parent=1 // pred_region
      %193 = dma.done [#allocation6], 256
    $region33: #{tpu_custom_call.1} parent=1 // pred_fallthru
      _
    %194 = vsyncpa [#allocation5], 1
    %195 = vsyncpa [#allocation8], 1
    %196 = vsyncpa [#allocation6], 1

</llo_original>
